<compile_context>
chip_gen: v5e
topology: v5e:2x2
jax: 0.10.0
libtpu: 0.0.40
codegen_flags: <defaults>
</compile_context>

<pallas_src>
import math
import jax
import jax.numpy as jnp
from jax.experimental import pallas as pl
from jax.experimental.pallas import tpu as pltpu

NEG_SLOPE = 0.01  # nn.LeakyReLU default negative_slope
LANE = 128
SUBLANE = 8


def _leaky_relu(x):
    return jnp.where(x > 0, x, NEG_SLOPE * x)


def mlp_kernel(x_ref, w1_ref, b1_ref, w2_ref, b2_ref, w3_ref, b3_ref, w4_ref,
               o_ref):
    # x_ref : (E, T)        bf16   (features on sublanes, samples on lanes)
    # wK    : (out, in)     bf16   (PyTorch weight layout; layer-3 dims padded)
    # bK    : (out, 1)      f32
    # o_ref : (1, T)        f32    (lane-dense output)
    x = x_ref[...]  # bf16

    h = jnp.dot(w1_ref[...], x, preferred_element_type=jnp.float32) + b1_ref[...]
    h = _leaky_relu(h)                                           # (E//2, T) f32
    # (Dropout: identity, eval mode)

    h = jnp.dot(w2_ref[...], h.astype(jnp.bfloat16),
                preferred_element_type=jnp.float32) + b2_ref[...]
    h = _leaky_relu(h)                                           # (E//4, T) f32

    h = jnp.dot(w3_ref[...], h.astype(jnp.bfloat16),
                preferred_element_type=jnp.float32) + b3_ref[...]
    h = _leaky_relu(h)                                           # (H3p, T) f32
    # Padded rows of w3/b3 are zero -> padded rows of h are exactly zero.

    # Final (H3p -> 1) layer: degenerate MXU matmul replaced by a VPU
    # broadcast-multiply + XLU sublane reduce; z stays lane-dense (1, T).
    # Padded columns of w4 are zero, so padded rows of h contribute nothing.
    w4 = w4_ref[...].astype(jnp.float32)                         # (1, H3p)
    z = jnp.sum(w4.T * h, axis=0, keepdims=True)                 # (1, T) f32

    # Sigmoid: exp on the EUP, exact reciprocal (flip approx=True for the
    # EUP-only path at ~1e-4 accuracy cost).
    o_ref[...] = pl.reciprocal(1.0 + jnp.exp(-z)).astype(o_ref.dtype)


def mlp_forward(x, params, *, row_tile=1024):
    """x: (N, E) float32.  params from init_params.  Returns (N, 1) float32."""
    N, E = x.shape
    h3 = params["w3"].shape[0]                       # E // 6
    h3p = -(-h3 // SUBLANE) * SUBLANE                # padded to sublane multiple

    # Lane-dense tiling over samples: pad N up to a multiple of 128, collapse
    # to a single grid step when N is small, otherwise use large (~1024-wide)
    # tiles so per-grid-step overhead is amortized and DMA stays near the HBM
    # roofline.
    n_pad = -(-N // LANE) * LANE
    tile = min(-(-row_tile // LANE) * LANE, n_pad)
    n_pad = -(-n_pad // tile) * tile
    grid = (n_pad // tile,)

    # Stream x in bf16 (halves HBM bytes), weights in bf16 (MXU-native);
    # biases stay f32 and are added to the f32 accumulators.
    x_t = x.T.astype(jnp.bfloat16)                    # (E, N)
    if n_pad != N:
        x_t = jnp.pad(x_t, ((0, 0), (0, n_pad - N)))

    w1 = params["w1"].astype(jnp.bfloat16)
    w2 = params["w2"].astype(jnp.bfloat16)
    w3 = jnp.pad(params["w3"], ((0, h3p - h3), (0, 0))).astype(jnp.bfloat16)
    w4 = jnp.pad(params["w4"], ((0, 0), (0, h3p - h3))).astype(jnp.bfloat16)
    b1, b2 = params["b1"], params["b2"]
    b3 = jnp.pad(params["b3"], ((0, h3p - h3), (0, 0)))

    def full_spec(arr):
        # Tiny weights/biases: whole array resident every grid step (same block
        # index each step -> no re-DMA across the grid).
        return pl.BlockSpec(arr.shape, lambda i: (0,) * arr.ndim)

    out = pl.pallas_call(
        mlp_kernel,
        out_shape=jax.ShapeDtypeStruct((1, n_pad), jnp.float32),
        grid_spec=pltpu.PrefetchScalarGridSpec(
            num_scalar_prefetch=0,
            grid=grid,
            in_specs=[
                pl.BlockSpec((E, tile), lambda i: (0, i)),   # x tile (lane-dense)
                full_spec(w1), full_spec(b1),
                full_spec(w2), full_spec(b2),
                full_spec(w3), full_spec(b3),
                full_spec(w4),
            ],
            out_specs=pl.BlockSpec((1, tile), lambda i: (0, i)),
        ),
        compiler_params=pltpu.CompilerParams(
            dimension_semantics=("parallel",)),   # megacore sharding on v7x
    )(x_t, w1, b1, w2, b2, w3, b3, w4)

    return out[0, :N][:, None]


def init_params(key, embedding_size):
    """Deterministic synthetic init matching the module's shapes.

    Weights are stored in PyTorch's (out_features, in_features) layout with
    xavier-uniform bounds; biases are zero column vectors (out, 1); the last
    Linear has no bias.
    """
    E = embedding_size
    dims = [E, E // 2, E // 4, E // 6, 1]
    params = {}
    keys = jax.random.split(key, 4)
    for li, (fan_in, fan_out) in enumerate(zip(dims[:-1], dims[1:]), start=1):
        bound = math.sqrt(6.0 / (fan_in + fan_out))
        w = jax.random.uniform(keys[li - 1], (fan_out, fan_in),
                               minval=-bound, maxval=bound,
                               dtype=jnp.float32)
        params[f"w{li}"] = w
        if li != 4:  # last layer: bias=False
            params[f"b{li}"] = jnp.zeros((fan_out, 1), dtype=jnp.float32)
    return params


def mlp_reference(x, params):
    """Plain-JAX reference mirroring the kernel's bf16-input / f32-accum math."""
    def lin(h, w, b):
        y = jnp.dot(h.astype(jnp.bfloat16), w.astype(jnp.bfloat16).T,
                    preferred_element_type=jnp.float32)
        return y if b is None else y + b.T
    h = _leaky_relu(lin(x, params["w1"], params["b1"]))
    h = _leaky_relu(lin(h, params["w2"], params["b2"]))
    h = _leaky_relu(lin(h, params["w3"], params["b3"]))
    z = jnp.dot(h, params["w4"].astype(jnp.bfloat16).astype(jnp.float32).T)
    return jax.nn.sigmoid(z)


if __name__ == "__main__":
    key = jax.random.PRNGKey(0)
    k_x, k_p = jax.random.split(key)

    N = 64              # number of (drug, disease) pair embeddings
    E = 32              # embedding_size
    x = jax.random.normal(k_x, (N, E), dtype=jnp.float32)
    params = init_params(k_p, E)

    out = mlp_forward(x, params)
    out = jax.block_until_ready(out)

    ref = mlp_reference(x, params)
    assert out.shape == (N, 1)
    assert jnp.allclose(out, ref, atol=1e-3, rtol=1e-3), "mismatch vs reference"

    print("KERNEL_OK")
</pallas_src>

<mosaic_0001>
module attributes {stable_mosaic.version = 11 : i64} {
  func.func @mlp_kernel(%arg0: i32, %arg1: memref<32x128xbf16, #tpu.memory_space<vmem>>, %arg2: memref<16x32xbf16, #tpu.memory_space<vmem>>, %arg3: memref<16x1xf32, #tpu.memory_space<vmem>>, %arg4: memref<8x16xbf16, #tpu.memory_space<vmem>>, %arg5: memref<8x1xf32, #tpu.memory_space<vmem>>, %arg6: memref<8x8xbf16, #tpu.memory_space<vmem>>, %arg7: memref<8x1xf32, #tpu.memory_space<vmem>>, %arg8: memref<1x8xbf16, #tpu.memory_space<vmem>>, %arg9: memref<1x128xf32, #tpu.memory_space<vmem>>) attributes {dimension_semantics = [#tpu.dimension_semantics<parallel>], iteration_bounds = array<i64: 1>, scalar_prefetch = 0 : i64, scratch_operands = 0 : i64, tpu.core_type = #tpu.core_type<tc>, window_params = [{transform_indices = @transform_0, window_bounds = array<i64: 32, 128>}, {pipeline_mode = #tpu.pipeline_mode<synchronous>, transform_indices = @transform_1, window_bounds = array<i64: 16, 32>}, {pipeline_mode = #tpu.pipeline_mode<synchronous>, transform_indices = @transform_2, window_bounds = array<i64: 16, 1>}, {pipeline_mode = #tpu.pipeline_mode<synchronous>, transform_indices = @transform_3, window_bounds = array<i64: 8, 16>}, {pipeline_mode = #tpu.pipeline_mode<synchronous>, transform_indices = @transform_4, window_bounds = array<i64: 8, 1>}, {pipeline_mode = #tpu.pipeline_mode<synchronous>, transform_indices = @transform_5, window_bounds = array<i64: 8, 8>}, {pipeline_mode = #tpu.pipeline_mode<synchronous>, transform_indices = @transform_6, window_bounds = array<i64: 8, 1>}, {pipeline_mode = #tpu.pipeline_mode<synchronous>, transform_indices = @transform_7, window_bounds = array<i64: 1, 8>}, {transform_indices = @transform_8, window_bounds = array<i64: 1, 128>}]} {
    %c0 = arith.constant 0 : index
    %c0_0 = arith.constant 0 : index
    %0 = vector.load %arg1[%c0, %c0_0] : memref<32x128xbf16, #tpu.memory_space<vmem>>, vector<32x128xbf16>
    %c0_1 = arith.constant 0 : index
    %c0_2 = arith.constant 0 : index
    %1 = vector.load %arg2[%c0_1, %c0_2] : memref<16x32xbf16, #tpu.memory_space<vmem>>, vector<16x32xbf16>
    %cst = arith.constant dense<0.000000e+00> : vector<16x128xf32>
    %2 = tpu.matmul %1, %0, %cst {dimension_numbers = #tpu.dot_dimension_numbers<[1], [0], [0], [1], [0, 0, 1, 1], [], []>} : vector<16x32xbf16>, vector<32x128xbf16>, vector<16x128xf32> -> vector<16x128xf32>
    %c0_3 = arith.constant 0 : index
    %c0_4 = arith.constant 0 : index
    %3 = vector.load %arg3[%c0_3, %c0_4] : memref<16x1xf32, #tpu.memory_space<vmem>>, vector<16x1xf32>
    %4 = vector.broadcast %3 : vector<16x1xf32> to vector<16x128xf32>
    %5 = arith.addf %2, %4 : vector<16x128xf32>
    %cst_5 = arith.constant 0.000000e+00 : f32
    %6 = vector.broadcast %cst_5 : f32 to vector<16x128xf32>
    %7 = arith.cmpf ogt, %5, %6 : vector<16x128xf32>
    %cst_6 = arith.constant 0.00999999977 : f32
    %8 = vector.broadcast %cst_6 : f32 to vector<16x128xf32>
    %9 = arith.mulf %8, %5 : vector<16x128xf32>
    %10 = arith.select %7, %5, %9 : vector<16x128xi1>, vector<16x128xf32>
    %c0_7 = arith.constant 0 : index
    %c0_8 = arith.constant 0 : index
    %11 = vector.load %arg4[%c0_7, %c0_8] : memref<8x16xbf16, #tpu.memory_space<vmem>>, vector<8x16xbf16>
    %12 = arith.truncf %10 : vector<16x128xf32> to vector<16x128xbf16>
    %cst_9 = arith.constant dense<0.000000e+00> : vector<8x128xf32>
    %13 = tpu.matmul %11, %12, %cst_9 {dimension_numbers = #tpu.dot_dimension_numbers<[1], [0], [0], [1], [0, 0, 1, 1], [], []>} : vector<8x16xbf16>, vector<16x128xbf16>, vector<8x128xf32> -> vector<8x128xf32>
    %c0_10 = arith.constant 0 : index
    %c0_11 = arith.constant 0 : index
    %14 = vector.load %arg5[%c0_10, %c0_11] : memref<8x1xf32, #tpu.memory_space<vmem>>, vector<8x1xf32>
    %15 = vector.broadcast %14 : vector<8x1xf32> to vector<8x128xf32>
    %16 = arith.addf %13, %15 : vector<8x128xf32>
    %cst_12 = arith.constant 0.000000e+00 : f32
    %17 = vector.broadcast %cst_12 : f32 to vector<8x128xf32>
    %18 = arith.cmpf ogt, %16, %17 : vector<8x128xf32>
    %cst_13 = arith.constant 0.00999999977 : f32
    %19 = vector.broadcast %cst_13 : f32 to vector<8x128xf32>
    %20 = arith.mulf %19, %16 : vector<8x128xf32>
    %21 = arith.select %18, %16, %20 : vector<8x128xi1>, vector<8x128xf32>
    %c0_14 = arith.constant 0 : index
    %c0_15 = arith.constant 0 : index
    %22 = vector.load %arg6[%c0_14, %c0_15] : memref<8x8xbf16, #tpu.memory_space<vmem>>, vector<8x8xbf16>
    %23 = arith.truncf %21 : vector<8x128xf32> to vector<8x128xbf16>
    %cst_16 = arith.constant dense<0.000000e+00> : vector<8x128xf32>
    %24 = tpu.matmul %22, %23, %cst_16 {dimension_numbers = #tpu.dot_dimension_numbers<[1], [0], [0], [1], [0, 0, 1, 1], [], []>} : vector<8x8xbf16>, vector<8x128xbf16>, vector<8x128xf32> -> vector<8x128xf32>
    %c0_17 = arith.constant 0 : index
    %c0_18 = arith.constant 0 : index
    %25 = vector.load %arg7[%c0_17, %c0_18] : memref<8x1xf32, #tpu.memory_space<vmem>>, vector<8x1xf32>
    %26 = vector.broadcast %25 : vector<8x1xf32> to vector<8x128xf32>
    %27 = arith.addf %24, %26 : vector<8x128xf32>
    %cst_19 = arith.constant 0.000000e+00 : f32
    %28 = vector.broadcast %cst_19 : f32 to vector<8x128xf32>
    %29 = arith.cmpf ogt, %27, %28 : vector<8x128xf32>
    %cst_20 = arith.constant 0.00999999977 : f32
    %30 = vector.broadcast %cst_20 : f32 to vector<8x128xf32>
    %31 = arith.mulf %30, %27 : vector<8x128xf32>
    %32 = arith.select %29, %27, %31 : vector<8x128xi1>, vector<8x128xf32>
    %c0_21 = arith.constant 0 : index
    %c0_22 = arith.constant 0 : index
    %33 = vector.load %arg8[%c0_21, %c0_22] : memref<1x8xbf16, #tpu.memory_space<vmem>>, vector<1x8xbf16>
    %34 = arith.extf %33 : vector<1x8xbf16> to vector<1x8xf32>
    %35 = tpu.transpose %34, [1, 0] : vector<1x8xf32> -> vector<8x1xf32>
    %36 = vector.broadcast %35 : vector<8x1xf32> to vector<8x128xf32>
    %37 = arith.mulf %36, %32 : vector<8x128xf32>
    %cst_23 = arith.constant dense<0.000000e+00> : vector<128xf32>
    %38 = vector.multi_reduction <add>, %37, %cst_23 [0] : vector<8x128xf32> to vector<128xf32>
    %39 = vector.shape_cast %38 : vector<128xf32> to vector<1x128xf32>
    %cst_24 = arith.constant 0.000000e+00 : f32
    %40 = vector.broadcast %cst_24 : f32 to vector<1x128xf32>
    %41 = arith.subf %40, %39 : vector<1x128xf32>
    %42 = math.exp %41 : vector<1x128xf32>
    %cst_25 = arith.constant 1.000000e+00 : f32
    %43 = vector.broadcast %cst_25 : f32 to vector<1x128xf32>
    %44 = arith.addf %43, %42 : vector<1x128xf32>
    %45 = tpu.reciprocal %44 : vector<1x128xf32> -> vector<1x128xf32>
    %c0_26 = arith.constant 0 : index
    %c0_27 = arith.constant 0 : index
    %46 = vector.load %arg9[%c0_26, %c0_27] : memref<1x128xf32, #tpu.memory_space<vmem>>, vector<1x128xf32>
    tpu.vector_store %arg9[%c0_26, %c0_27], %45 {strides = array<i32>} : memref<1x128xf32, #tpu.memory_space<vmem>>, vector<1x128xf32>,
    return
  }
  func.func @transform_0(%arg0: i32) -> (i32, i32) {
    %c0_i32 = arith.constant 0 : i32
    %c0_i32_0 = arith.constant 0 : i32
    return %c0_i32, %arg0 : i32, i32
  }
  func.func @transform_1(%arg0: i32) -> (i32, i32) {
    %c0_i32 = arith.constant 0 : i32
    %c0_i32_0 = arith.constant 0 : i32
    %c0_i32_1 = arith.constant 0 : i32
    return %c0_i32, %c0_i32_0 : i32, i32
  }
  func.func @transform_2(%arg0: i32) -> (i32, i32) {
    %c0_i32 = arith.constant 0 : i32
    %c0_i32_0 = arith.constant 0 : i32
    %c0_i32_1 = arith.constant 0 : i32
    return %c0_i32, %c0_i32_0 : i32, i32
  }
  func.func @transform_3(%arg0: i32) -> (i32, i32) {
    %c0_i32 = arith.constant 0 : i32
    %c0_i32_0 = arith.constant 0 : i32
    %c0_i32_1 = arith.constant 0 : i32
    return %c0_i32, %c0_i32_0 : i32, i32
  }
  func.func @transform_4(%arg0: i32) -> (i32, i32) {
    %c0_i32 = arith.constant 0 : i32
    %c0_i32_0 = arith.constant 0 : i32
    %c0_i32_1 = arith.constant 0 : i32
    return %c0_i32, %c0_i32_0 : i32, i32
  }
  func.func @transform_5(%arg0: i32) -> (i32, i32) {
    %c0_i32 = arith.constant 0 : i32
    %c0_i32_0 = arith.constant 0 : i32
    %c0_i32_1 = arith.constant 0 : i32
    return %c0_i32, %c0_i32_0 : i32, i32
  }
  func.func @transform_6(%arg0: i32) -> (i32, i32) {
    %c0_i32 = arith.constant 0 : i32
    %c0_i32_0 = arith.constant 0 : i32
    %c0_i32_1 = arith.constant 0 : i32
    return %c0_i32, %c0_i32_0 : i32, i32
  }
  func.func @transform_7(%arg0: i32) -> (i32, i32) {
    %c0_i32 = arith.constant 0 : i32
    %c0_i32_0 = arith.constant 0 : i32
    %c0_i32_1 = arith.constant 0 : i32
    return %c0_i32, %c0_i32_0 : i32, i32
  }
  func.func @transform_8(%arg0: i32) -> (i32, i32) {
    %c0_i32 = arith.constant 0 : i32
    %c0_i32_0 = arith.constant 0 : i32
    return %c0_i32, %arg0 : i32, i32
  }
}

</mosaic_0001>

<llo_original>
// kernel: tpu_custom_call.1
$region0: #{tpu_custom_call.1}
  #allocation0 [shape = 'u32[]', space=smem, size = 0x4, offset = 0x4, fixed_abs, tag = 'smem constant byte address 0x4 - core index']
  #allocation1 [shape = 'u32[72,128]{1,0:T(1,128)}', space=vmem, size = 0x9000, scoped, tag = 'internal scratch']
  %s0 = inlined_call_operand.vmem [shape: bf16[32,128], index: 0, kind: input, shape index: {}]
  %s1 = inlined_call_operand.vmem [shape: bf16[16,32], index: 1, kind: input, shape index: {}]
  %s2 = inlined_call_operand.vmem [shape: f32[16,1], index: 2, kind: input, shape index: {}]
  %s3 = inlined_call_operand.vmem [shape: bf16[8,16], index: 3, kind: input, shape index: {}]
  %s4 = inlined_call_operand.vmem [shape: f32[8,1], index: 4, kind: input, shape index: {}]
  %s5 = inlined_call_operand.vmem [shape: bf16[8,8], index: 5, kind: input, shape index: {}]
  %s6 = inlined_call_operand.vmem [shape: f32[8,1], index: 6, kind: input, shape index: {}]
  %s7 = inlined_call_operand.vmem [shape: bf16[1,8], index: 7, kind: input, shape index: {}]
  %s8 = inlined_call_operand.hbm [shape: f32[1,128], index: 8, kind: output, shape index: {}]
  %s9 = sld [smem:[#allocation0]]
  $region42: #{tpu_custom_call.1} parent=0
    _
  %s11 = ssub.s32 1, %s9
  %s12 = scalar_select 0, %s11, %s9
  $region1: #{tpu_custom_call.1} parent=0
    #allocation2 [shape = 'u8[512]{0}', space=vmem, size = 0x400, scoped, tag = 'output window, operand 0, single buffered']
    #allocation3 [shape = 's32[1]{0}', space=sflag, size = 0x4, scoped, tag = 'scoped memory for tpu_custom_call.1']
    %13 = vsyncpa [#allocation3], 0
    // Predicated region
    $region2: #{tpu_custom_call.1} parent=1 // pred_check
      _
    $region3: #{tpu_custom_call.1} parent=1 // pred_check_branch
      %15 = sbr.rel (0) target = $region5
    $region4: #{tpu_custom_call.1} parent=1 // pred_region
      _
    $region5: #{tpu_custom_call.1} parent=1 // pred_fallthru
      _
    // Predicated region
    $region6: #{tpu_custom_call.1} parent=1 // pred_check
      _
    $region7: #{tpu_custom_call.1} parent=1 // pred_check_branch
      %17 = sbr.rel (0) target = $region9
    $region8: #{tpu_custom_call.1} parent=1 // pred_region
      _
    $region9: #{tpu_custom_call.1} parent=1 // pred_fallthru
      _
    // Predicated region
    $region10: #{tpu_custom_call.1} parent=1 // pred_check
      _
    $region11: #{tpu_custom_call.1} parent=1 // pred_check_branch
      %19 = sbr.rel (0) target = $region13
    $region12: #{tpu_custom_call.1} parent=1 // pred_region
      _
    $region13: #{tpu_custom_call.1} parent=1 // pred_fallthru
      _
    // Predicated region
    $region14: #{tpu_custom_call.1} parent=1 // pred_check
      _
    $region15: #{tpu_custom_call.1} parent=1 // pred_check_branch
      %21 = sbr.rel (0) target = $region17
    $region16: #{tpu_custom_call.1} parent=1 // pred_region
      _
    $region17: #{tpu_custom_call.1} parent=1 // pred_fallthru
      _
    // Predicated region
    $region18: #{tpu_custom_call.1} parent=1 // pred_check
      _
    $region19: #{tpu_custom_call.1} parent=1 // pred_check_branch
      %23 = sbr.rel (0) target = $region21
    $region20: #{tpu_custom_call.1} parent=1 // pred_region
      _
    $region21: #{tpu_custom_call.1} parent=1 // pred_fallthru
      _
    // Predicated region
    $region22: #{tpu_custom_call.1} parent=1 // pred_check
      _
    $region23: #{tpu_custom_call.1} parent=1 // pred_check_branch
      %25 = sbr.rel (0) target = $region25
    $region24: #{tpu_custom_call.1} parent=1 // pred_region
      _
    $region25: #{tpu_custom_call.1} parent=1 // pred_fallthru
      _
    // Predicated region
    $region26: #{tpu_custom_call.1} parent=1 // pred_check
      _
    $region27: #{tpu_custom_call.1} parent=1 // pred_check_branch
      %27 = sbr.rel (0) target = $region29
    $region28: #{tpu_custom_call.1} parent=1 // pred_region
      _
    $region29: #{tpu_custom_call.1} parent=1 // pred_fallthru
      _
    // Predicated region
    $region30: #{tpu_custom_call.1} parent=1 // pred_check
      _
    $region31: #{tpu_custom_call.1} parent=1 // pred_check_branch
      %29 = sbr.rel (0) target = $region33
    $region32: #{tpu_custom_call.1} parent=1 // pred_region
      _
    $region33: #{tpu_custom_call.1} parent=1 // pred_fallthru
      _
    %v31 = vld [vmem:[%s0] sm:$0xf]
    %v32 = vld [vmem:[%s0 + $0x4] sm:$0xf]
    %v33 = vld [vmem:[%s0 + $0x8] sm:$0xf]
    %v34 = vld [vmem:[%s0 + $0xc] sm:$0xf]
    %v35 = vld [vmem:[%s1] sm:$0xf]
    %v36 = vld [vmem:[%s1 + $0x4] sm:$0xf]
    %v37 = vld [vmem:[%s2] sm:$0xff]
    %v38 = vld [vmem:[%s2 + $0x8] sm:$0xff]
    %40 = vset.pattern.permute.xlu0 0
    %41 = vperm.xlu0 %40, %v37
    %v42 = vpop.permute.xlu0 %41
    %45 = vset.pattern.permute.xlu0 0
    %46 = vperm.xlu0 %45, %v38
    %v47 = vpop.permute.xlu0 %46
    %v51 = vunpack.c.l.b16 %v35
    %v52 = vunpack.c.l.b16 %v36
    %v53 = vpack.c.b16 %v52, %v51
    %v58 = vunpack.c.l.b16 %v31
    %v59 = vunpack.c.l.b16 %v32
    %v60 = vunpack.c.l.b16 %v33
    %v61 = vunpack.c.l.b16 %v34
    %v62 = vpack.c.b16 %v59, %v58
    %v63 = vpack.c.b16 %v61, %v60
    %vm66 = vcmask 261120
    %v68 = vsel %vm66, %v53, 0
    %70 = vmatpush.bf16.msra.mxu0 0
    %71 = vmatpush.bf16.msra.mxu0 0
    %72 = vmatpush.bf16.msra.mxu0 0
    %73 = vmatpush.bf16.msra.mxu0 0
    %74 = vmatpush.bf16.msra.mxu0 0
    %75 = vmatpush.bf16.msra.mxu0 0
    %76 = vmatpush.bf16.msra.mxu0 %v63
    %77 = vmatpush.bf16.msra.mxu0 %v62
    %78 = vmatmul.bf16.gmra.mxu0 %v68
    %v79 = vpop.f32.mrf.mxu0
    %v80 = vadd.f32 %v42, %v79
    %v81 = vpop.f32.mrf.mxu0
    %v82 = vadd.f32 %v47, %v81
    %83 = vdwg.mxu0
    %vm84 = vcmp.gt.f32.partialorder %v80, 0.0
    %vm85 = vcmp.gt.f32.partialorder %v82, 0.0
    %v86 = vmul.f32 %v80, 0.01
    %v87 = vmul.f32 %v82, 0.01
    %v88 = vsel %vm84, %v80, %v86
    %v89 = vsel %vm85, %v82, %v87
    %v90 = vld [vmem:[%s3] sm:$0xf]
    %v91 = vpack.c.bf16 %v89, %v88
    %v92 = vld [vmem:[%s4] sm:$0xff]
    %94 = vset.pattern.permute.xlu0 0
    %95 = vperm.xlu0 %94, %v92
    %v96 = vpop.permute.xlu0 %95
    %vm98 = vcmask 130048
    %v100 = vsel %vm98, %v90, 0
    %102 = vmatpush.bf16.msra.mxu0 0
    %103 = vmatpush.bf16.msra.mxu0 0
    %104 = vmatpush.bf16.msra.mxu0 0
    %105 = vmatpush.bf16.msra.mxu0 0
    %106 = vmatpush.bf16.msra.mxu0 0
    %107 = vmatpush.bf16.msra.mxu0 0
    %108 = vmatpush.bf16.msra.mxu0 0
    %109 = vmatpush.bf16.msra.mxu0 %v91
    %110 = vmatmul.bf16.gmra.mxu0 %v100
    %v111 = vpop.f32.mrf.mxu0
    %v112 = vadd.f32 %v96, %v111
    %v113 = vpop.f32.mrf.mxu0
    %114 = vdwg.mxu0
    %vm115 = vcmp.gt.f32.partialorder %v112, 0.0
    %v116 = vmul.f32 %v112, 0.01
    %v117 = vsel %vm115, %v112, %v116
    %v118 = vld [vmem:[%s5] sm:$0xf]
    %v119 = vpack.c.bf16 %v117, %v117
    %v120 = vld [vmem:[%s6] sm:$0xff]
    %122 = vset.pattern.permute.xlu0 0
    %123 = vperm.xlu0 %122, %v120
    %v124 = vpop.permute.xlu0 %123
    %vm126 = vcmask 64512
    %v128 = vsel %vm126, %v118, 0
    %vm130 = vcmask 1043456
    %v132 = vsel %vm130, %v119, 0
    %134 = vmatpush.bf16.msra.mxu0 0
    %135 = vmatpush.bf16.msra.mxu0 0
    %136 = vmatpush.bf16.msra.mxu0 0
    %137 = vmatpush.bf16.msra.mxu0 0
    %138 = vmatpush.bf16.msra.mxu0 0
    %139 = vmatpush.bf16.msra.mxu0 0
    %140 = vmatpush.bf16.msra.mxu0 0
    %141 = vmatpush.bf16.msra.mxu0 %v132
    %142 = vmatmul.bf16.gmra.mxu0 %v128
    %v143 = vpop.f32.mrf.mxu0
    %v144 = vadd.f32 %v124, %v143
    %v145 = vpop.f32.mrf.mxu0
    %146 = vdwg.mxu0
    %vm147 = vcmp.gt.f32.partialorder %v144, 0.0
    %v148 = vmul.f32 %v144, 0.01
    %v149 = vsel %vm147, %v144, %v148
    %v150 = vld [vmem:[%s7] sm:$0x1]
    %v151 = vunpack.c.l.bf16 %v150
    %152 = vxpose.xlu0.b32.start [1/16] %v151, 128
    %153 = vxpose.xlu0.b32.cont [2/16] 0.0, 128
    %154 = vxpose.xlu0.b32.cont [3/16] 0.0, 128
    %155 = vxpose.xlu0.b32.cont [4/16] 0.0, 128
    %156 = vxpose.xlu0.b32.cont [5/16] 0.0, 128
    %157 = vxpose.xlu0.b32.cont [6/16] 0.0, 128
    %158 = vxpose.xlu0.b32.cont [7/16] 0.0, 128
    %159 = vxpose.xlu0.b32.cont [8/16] 0.0, 128
    %160 = vxpose.xlu0.b32.cont [9/16] 0.0, 128
    %161 = vxpose.xlu0.b32.cont [10/16] 0.0, 128
    %162 = vxpose.xlu0.b32.cont [11/16] 0.0, 128
    %163 = vxpose.xlu0.b32.cont [12/16] 0.0, 128
    %164 = vxpose.xlu0.b32.cont [13/16] 0.0, 128
    %165 = vxpose.xlu0.b32.cont [14/16] 0.0, 128
    %166 = vxpose.xlu0.b32.cont [15/16] 0.0, 128
    %167 = vxpose.xlu0.b32.end [16/16] 0.0, 128
    %v168 = vpop.trf.xlu0
    %v169 = vpop.trf.xlu0
    %v170 = vpop.trf.xlu0
    %v171 = vpop.trf.xlu0
    %v172 = vpop.trf.xlu0
    %v173 = vpop.trf.xlu0
    %v174 = vpop.trf.xlu0
    %v175 = vpop.trf.xlu0
    %v176 = vpop.trf.xlu0
    %v177 = vpop.trf.xlu0
    %v178 = vpop.trf.xlu0
    %v179 = vpop.trf.xlu0
    %v180 = vpop.trf.xlu0
    %v181 = vpop.trf.xlu0
    %v182 = vpop.trf.xlu0
    %v183 = vpop.trf.xlu0
    %185 = vset.pattern.permute.xlu0 0
    %186 = vperm.xlu0 %185, %v168
    %v187 = vpop.permute.xlu0 %186
    %v189 = vmul.f32 %v187, %v149
    %v190 = vrot.slane %v189, 4
    %v191 = vadd.f32 %v189, %v190
    %v192 = vrot.slane %v191, 2
    %v193 = vadd.f32 %v191, %v192
    %v194 = vrot.slane %v193, 1
    %v195 = vadd.f32 %v193, %v194
    %v196 = vsub.f32 0.0, %v195
    %v197 = vmul.f32 %v196, 1.442695
    %v198 = vpow.pop %v197
    %v199 = vadd.f32 %v198, 1.0
    %v200 = vrcp.pop %v199
    %v201 = vmul.f32 %v199, %v200
    %v202 = vsub.f32 1.0, %v201
    %v203 = vmul.f32 %v200, %v202
    %v204 = vadd.f32 %v200, %v203
    %vm205 = vweird.f32 %v199
    %vm206 = vweird.f32 %v200
    %vm207 = vmor %vm205, %vm206
    %v208 = vsel %vm207, %v200, %v204
    %v209 = vand.u32 2147483647, %v199
    %vm210 = vcmp.eq.f32.partialorder %v209, 8.507059e+37
    %v211 = vand.u32 %v199, 2147483648
    %v212 = vor.u32 1.1754944e-38, %v211
    %v213 = vsel %vm210, %v212, %v208
    %214 = vst [vmem:[#allocation2] sm:$0x1] %v213
    // Predicated region
    $region34: #{tpu_custom_call.1} parent=1 // pred_check
      _
    $region35: #{tpu_custom_call.1} parent=1 // pred_check_branch
      %216 = sbr.rel (0) target = $region37
    $region36: #{tpu_custom_call.1} parent=1 // pred_region
      %218 = vsyncadd [#allocation3], 0
      %s220 = sshll.u32 [#allocation2], 4
      %s221 = int_to_ptr.vmem [resolvable:$true] %s220
      %s222 = sshll.u32 %s8, 4
      %s223 = int_to_ptr.hbm [resolvable:$true] %s222
      %225 = dma.vmem_to_hbm [thread:$0]  %s221, 16, %s223, [#allocation3]
    $region37: #{tpu_custom_call.1} parent=1 // pred_fallthru
      _
    // Predicated region
    $region38: #{tpu_custom_call.1} parent=1 // pred_check
      _
    $region39: #{tpu_custom_call.1} parent=1 // pred_check_branch
      %227 = sbr.rel (0) target = $region41
    $region40: #{tpu_custom_call.1} parent=1 // pred_region
      %229 = dma.done [#allocation3], 16
    $region41: #{tpu_custom_call.1} parent=1 // pred_fallthru
      _
    %230 = vsyncpa [#allocation3], 1

</llo_original>
